<compile_context>
chip_gen: v6e
topology: v6e:2x2x1
jax: 0.10.0
libtpu: 0.0.40
codegen_flags: <defaults>
</compile_context>

<pallas_src>
import functools

import jax
import jax.numpy as jnp
from jax.experimental import pallas as pl
from jax.experimental.pallas import tpu as pltpu


# ---------------------------------------------------------------------------
# helpers
# ---------------------------------------------------------------------------

def _round_up(x: int, m: int) -> int:
    return (x + m - 1) // m * m


_RESIDENT_MAX_NODES = 1024            # keeps the in-kernel one-hot small
_RESIDENT_MAX_TABLE_BYTES = 4 << 20   # resident table budget (fits v7x 64 MiB VMEM easily)
_VMEM_LIMIT_BYTES = 32 * 1024 * 1024  # <= default scoped limit on v6e/v7x, raises v5e's 16 MiB


# ---------------------------------------------------------------------------
# Fast path: VMEM-resident table, batched one-hot MXU gather
# ---------------------------------------------------------------------------

def _resident_gather_kernel(ids_ref, table_ref, out_ref):
    # ids_ref:   (TR, 1) int32 block of node ids for this grid step.
    # table_ref: (num_nodes_p, h_dim_p) full embedding table, VMEM-resident
    #            across the whole grid (constant index_map).
    # out_ref:   (TR, h_dim_p) output block.
    tr = out_ref.shape[0]
    nn = table_ref.shape[0]
    ids = ids_ref[...]                                             # (TR, 1) int32
    iota = jax.lax.broadcasted_iota(jnp.int32, (tr, nn), 1)        # (TR, NN)
    one_hot = (iota == ids).astype(table_ref.dtype)                # exact 0/1
    out_ref[...] = jnp.dot(
        one_hot, table_ref[...], preferred_element_type=jnp.float32
    ).astype(out_ref.dtype)


def _gather_resident(table, ids):
    num_nodes, h_dim = table.shape
    n = ids.shape[0]

    nn_p = _round_up(num_nodes, 8)
    hd_p = _round_up(h_dim, 128)          # lane-dense output (unmasked vst)
    n_p8 = _round_up(n, 8)
    block_rows = min(256, n_p8)           # batch many ids per grid step
    n_p = _round_up(n, block_rows)

    table_p = table
    if (nn_p, hd_p) != (num_nodes, h_dim):
        table_p = jnp.pad(table, ((0, nn_p - num_nodes), (0, hd_p - h_dim)))
    ids_p = ids if n_p == n else jnp.pad(ids, (0, n_p - n))
    ids_2d = ids_p.reshape(n_p, 1)

    grid = (n_p // block_rows,)
    out = pl.pallas_call(
        _resident_gather_kernel,
        out_shape=jax.ShapeDtypeStruct((n_p, hd_p), table.dtype),
        grid_spec=pltpu.PrefetchScalarGridSpec(
            num_scalar_prefetch=0,
            grid=grid,
            in_specs=[
                # ids: (TR, 1) block per grid step (sublane multiple of 8).
                pl.BlockSpec((block_rows, 1), lambda i: (i, 0)),
                # table: constant block index -> stays resident in VMEM.
                pl.BlockSpec((nn_p, hd_p), lambda i: (0, 0)),
            ],
            out_specs=pl.BlockSpec((block_rows, hd_p), lambda i: (i, 0)),
        ),
        compiler_params=pltpu.CompilerParams(
            dimension_semantics=("parallel",),
            vmem_limit_bytes=_VMEM_LIMIT_BYTES,
        ),
    )(ids_2d, table_p)
    return out[:n, :h_dim]


# ---------------------------------------------------------------------------
# Fallback: streamed data-dependent row gather (large tables)
# ---------------------------------------------------------------------------

def _streamed_gather_kernel(idx_ref, table_row_ref, out_ref):
    # idx_ref: scalar-prefetched ids (SMEM), consumed by the index_maps.
    out_ref[...] = table_row_ref[...]


def _gather_streamed(table, ids):
    num_nodes, h_dim = table.shape
    n = ids.shape[0]
    grid_spec = pltpu.PrefetchScalarGridSpec(
        num_scalar_prefetch=1,
        grid=(n,),
        in_specs=[
            # Data-dependent row gather with a 4-deep pipeline to keep several
            # small row DMAs in flight (latency-, not bandwidth-, bound).
            pl.BlockSpec(
                (1, h_dim),
                lambda i, idx_ref: (idx_ref[i], 0),
                pipeline_mode=pl.Buffered(4),
            ),
        ],
        out_specs=pl.BlockSpec((1, h_dim), lambda i, idx_ref: (i, 0)),
    )
    return pl.pallas_call(
        _streamed_gather_kernel,
        out_shape=jax.ShapeDtypeStruct((n, h_dim), table.dtype),
        grid_spec=grid_spec,
        compiler_params=pltpu.CompilerParams(
            dimension_semantics=("parallel",),
            vmem_limit_bytes=_VMEM_LIMIT_BYTES,
        ),
    )(ids, table)


# ---------------------------------------------------------------------------
# Public wrapper: EmbeddingLayer.forward(g, h, r, norm) == table[h.squeeze()]
# ---------------------------------------------------------------------------

def embedding_layer_forward(table, ids, *, force_streamed=False):
    """Pallas equivalent of torch.nn.Embedding(num_nodes, h_dim)(ids.squeeze()).

    Args:
      table: [num_nodes, h_dim] embedding weight.
      ids:   integer node ids; size-1 dims are squeezed (matches torch .squeeze()).
      force_streamed: force the large-table streamed-gather path (for testing).

    Returns:
      [N, h_dim] gathered embeddings.
    """
    ids_flat = jnp.squeeze(ids).astype(jnp.int32)
    if ids_flat.ndim == 0:
        ids_flat = ids_flat[None]
    elif ids_flat.ndim > 1:
        ids_flat = ids_flat.reshape(-1)

    num_nodes, h_dim = table.shape
    # Clamp so an out-of-range id can never drive an OOB DMA / gather.
    ids_flat = jnp.clip(ids_flat, 0, num_nodes - 1)

    nn_p = _round_up(num_nodes, 8)
    hd_p = _round_up(h_dim, 128)
    table_bytes = nn_p * hd_p * jnp.dtype(table.dtype).itemsize

    if (not force_streamed
            and num_nodes <= _RESIDENT_MAX_NODES
            and table_bytes <= _RESIDENT_MAX_TABLE_BYTES):
        return _gather_resident(table, ids_flat)
    return _gather_streamed(table, ids_flat)


# ---------------------------------------------------------------------------
# Demo / self-check
# ---------------------------------------------------------------------------

if __name__ == "__main__":
    key = jax.random.PRNGKey(0)
    k_w, k_i, k_w2, k_i2 = jax.random.split(key, 4)

    # --- Case 1: shapes consistent with EmbeddingLayer(num_nodes=64, h_dim=128).
    num_nodes, h_dim, n_ids = 64, 128, 16
    emb_weight = jax.random.normal(k_w, (num_nodes, h_dim), dtype=jnp.float32)
    # h in the PyTorch module is an [N, 1] tensor of node ids; it gets squeezed.
    h = jax.random.randint(k_i, (n_ids, 1), 0, num_nodes, dtype=jnp.int32)

    out = jax.block_until_ready(embedding_layer_forward(emb_weight, h))
    ref = emb_weight[jnp.squeeze(h)]
    assert out.shape == (n_ids, h_dim)
    assert jnp.allclose(out, ref), "resident-path mismatch vs reference gather"

    # Also exercise the large-table streamed fallback path on the same data.
    out_s = jax.block_until_ready(
        embedding_layer_forward(emb_weight, h, force_streamed=True))
    assert jnp.allclose(out_s, ref), "streamed-path mismatch vs reference gather"

    # --- Case 2: ragged shapes (exercise row / lane padding in the wrapper).
    num_nodes2, h_dim2, n_ids2 = 37, 72, 5
    emb_weight2 = jax.random.normal(k_w2, (num_nodes2, h_dim2), dtype=jnp.float32)
    h2 = jax.random.randint(k_i2, (n_ids2, 1), 0, num_nodes2, dtype=jnp.int32)
    out2 = jax.block_until_ready(embedding_layer_forward(emb_weight2, h2))
    ref2 = emb_weight2[jnp.squeeze(h2)]
    assert out2.shape == (n_ids2, h_dim2)
    assert jnp.allclose(out2, ref2), "padded-path mismatch vs reference gather"

    print("KERNEL_OK")
</pallas_src>

<mosaic_0001>
module attributes {stable_mosaic.version = 11 : i64} {
  func.func @_resident_gather_kernel(%arg0: i32, %arg1: memref<16x1xi32, #tpu.memory_space<vmem>>, %arg2: memref<64x128xf32, #tpu.memory_space<vmem>>, %arg3: memref<16x128xf32, #tpu.memory_space<vmem>>) attributes {dimension_semantics = [#tpu.dimension_semantics<parallel>], iteration_bounds = array<i64: 1>, scalar_prefetch = 0 : i64, scratch_operands = 0 : i64, tpu.core_type = #tpu.core_type<tc>, window_params = [{transform_indices = @transform_0, window_bounds = array<i64: 16, 1>}, {pipeline_mode = #tpu.pipeline_mode<synchronous>, transform_indices = @transform_1, window_bounds = array<i64: 64, 128>}, {transform_indices = @transform_2, window_bounds = array<i64: 16, 128>}]} {
    %c0 = arith.constant 0 : index
    %c0_0 = arith.constant 0 : index
    %0 = vector.load %arg1[%c0, %c0_0] : memref<16x1xi32, #tpu.memory_space<vmem>>, vector<16x1xi32>
    %1 = tpu.iota {dimensions = array<i32: 1>} : vector<16x64xi32>
    %2 = vector.broadcast %0 : vector<16x1xi32> to vector<16x64xi32>
    %3 = arith.cmpi eq, %1, %2 : vector<16x64xi32>
    %4 = arith.extui %3 : vector<16x64xi1> to vector<16x64xi32>
    %5 = arith.sitofp %4 : vector<16x64xi32> to vector<16x64xf32>
    %c0_1 = arith.constant 0 : index
    %c0_2 = arith.constant 0 : index
    %6 = vector.load %arg2[%c0_1, %c0_2] : memref<64x128xf32, #tpu.memory_space<vmem>>, vector<64x128xf32>
    %cst = arith.constant dense<0.000000e+00> : vector<16x128xf32>
    %7 = tpu.matmul %5, %6, %cst {dimension_numbers = #tpu.dot_dimension_numbers<[1], [0], [0], [1], [0, 0, 1, 1], [], []>} : vector<16x64xf32>, vector<64x128xf32>, vector<16x128xf32> -> vector<16x128xf32>
    %c0_3 = arith.constant 0 : index
    %c0_4 = arith.constant 0 : index
    %8 = vector.load %arg3[%c0_3, %c0_4] : memref<16x128xf32, #tpu.memory_space<vmem>>, vector<16x128xf32>
    tpu.vector_store %arg3[%c0_3, %c0_4], %7 {strides = array<i32>} : memref<16x128xf32, #tpu.memory_space<vmem>>, vector<16x128xf32>,
    return
  }
  func.func @transform_0(%arg0: i32) -> (i32, i32) {
    %c0_i32 = arith.constant 0 : i32
    %c0_i32_0 = arith.constant 0 : i32
    return %arg0, %c0_i32 : i32, i32
  }
  func.func @transform_1(%arg0: i32) -> (i32, i32) {
    %c0_i32 = arith.constant 0 : i32
    %c0_i32_0 = arith.constant 0 : i32
    %c0_i32_1 = arith.constant 0 : i32
    return %c0_i32, %c0_i32_0 : i32, i32
  }
  func.func @transform_2(%arg0: i32) -> (i32, i32) {
    %c0_i32 = arith.constant 0 : i32
    %c0_i32_0 = arith.constant 0 : i32
    return %arg0, %c0_i32 : i32, i32
  }
}

</mosaic_0001>

<llo_original>
// kernel: tpu_custom_call.1
$region0: #{tpu_custom_call.1}
  #allocation0 [shape = 'u32[]', space=smem, size = 0x4, offset = 0x4, fixed_abs, tag = 'smem constant byte address 0x4 - core index']
  #allocation1 [shape = 'u32[144,128]{1,0:T(1,128)}', space=vmem, size = 0x12000, scoped, tag = 'internal scratch']
  %s0 = inlined_call_operand.vmem [shape: s32[16,1], index: 0, kind: input, shape index: {}]
  %s1 = inlined_call_operand.hbm [shape: f32[64,128], index: 1, kind: input, shape index: {}]
  %s2 = inlined_call_operand.hbm [shape: f32[16,128], index: 2, kind: output, shape index: {}]
  %s3 = sld [smem:[#allocation0]]
  $region22: #{tpu_custom_call.1} parent=0
    _
  %s5 = ssub.s32 1, %s3
  %s6 = scalar_select 0, %s5, %s3
  $region1: #{tpu_custom_call.1} parent=0
    #allocation2 [shape = 'u8[32768]{0}', space=vmem, size = 0x8000, scoped, tag = 'input window, operand 1, single buffered']
    #allocation3 [shape = 's32[1]{0}', space=sflag, size = 0x4, scoped, tag = 'scoped memory for tpu_custom_call.1']
    #allocation4 [shape = 's32[1]{0}', space=sflag, size = 0x4, scoped, tag = 'scoped memory for tpu_custom_call.1']
    #allocation5 [shape = 'u8[8192]{0}', space=vmem, size = 0x2000, scoped, tag = 'output window, operand 0, single buffered']
    %7 = vsyncpa [#allocation3], 0
    %8 = vsyncpa [#allocation4], 0
    // Predicated region
    $region2: #{tpu_custom_call.1} parent=1 // pred_check
      _
    $region3: #{tpu_custom_call.1} parent=1 // pred_check_branch
      %10 = sbr.rel (0) target = $region5
    $region4: #{tpu_custom_call.1} parent=1 // pred_region
      _
    $region5: #{tpu_custom_call.1} parent=1 // pred_fallthru
      _
    // Predicated region
    $region6: #{tpu_custom_call.1} parent=1 // pred_check
      _
    $region7: #{tpu_custom_call.1} parent=1 // pred_check_branch
      %12 = sbr.rel (0) target = $region9
    $region8: #{tpu_custom_call.1} parent=1 // pred_region
      %s14 = ssub.s32 1024, 1024
      %15 = vsyncadd [#allocation3], %s14
      %s16 = sshll.u32 [#allocation2], 4
      %s17 = int_to_ptr.vmem [resolvable:$true] %s16
      %22 = dma.hbm_to_vmem [thread:$0]  %s1, 1024, %s17, [#allocation3], 128, 128, 8
    $region9: #{tpu_custom_call.1} parent=1 // pred_fallthru
      _
    // Predicated region
    $region10: #{tpu_custom_call.1} parent=1 // pred_check
      _
    $region11: #{tpu_custom_call.1} parent=1 // pred_check_branch
      %24 = sbr.rel (0) target = $region13
    $region12: #{tpu_custom_call.1} parent=1 // pred_region
      %25 = dma.done [#allocation3], 1024
    $region13: #{tpu_custom_call.1} parent=1 // pred_fallthru
      _
    %v26 = vld [vmem:[%s0] sm:$0xff]
    %v27 = vld [vmem:[%s0 + $0x8] sm:$0xff]
    %v28 = vlaneseq
    %v29 = vand.u32 %v28, 127
    %30 = vset.pattern.permute.xlu0 0
    %31 = vperm.xlu0 %30, %v26
    %v32 = vpop.permute.xlu0 %31
    %33 = vset.pattern.permute.xlu0 0
    %34 = vperm.xlu0 %33, %v27
    %v35 = vpop.permute.xlu0 %34
    %vm36 = vcmp.eq.s32.totalorder %v29, %v32
    %vm37 = vcmp.eq.s32.totalorder %v29, %v35
    %v38 = vsel %vm36, 1, 0
    %v39 = vsel %vm37, 1, 0
    %v40 = vcvt.s32.f32 %v38
    %v41 = vcvt.s32.f32 %v39
    %v42 = vld [vmem:[#allocation2] sm:$0xff]
    %v43 = vld [vmem:[#allocation2 + $0x8] sm:$0xff]
    %v44 = vld [vmem:[#allocation2 + $0x10] sm:$0xff]
    %v45 = vld [vmem:[#allocation2 + $0x18] sm:$0xff]
    %v46 = vld [vmem:[#allocation2 + $0x20] sm:$0xff]
    %v47 = vld [vmem:[#allocation2 + $0x28] sm:$0xff]
    %v48 = vld [vmem:[#allocation2 + $0x30] sm:$0xff]
    %v49 = vld [vmem:[#allocation2 + $0x38] sm:$0xff]
    %vm50 = vcmask 523264
    %v52 = vsel %vm50, %v40, 0
    %v55 = vsel %vm50, %v41, 0
    %57 = vmatprep.subr.mxu0 0.0
    %58 = vmatpush1.msra.mxu0 0.0
    %59 = vmatprep.subr.mxu0 0.0
    %60 = vmatpush1.msra.mxu0 0.0
    %61 = vmatprep.subr.mxu0 0.0
    %62 = vmatpush1.msra.mxu0 0.0
    %63 = vmatprep.subr.mxu0 0.0
    %64 = vmatpush1.msra.mxu0 0.0
    %65 = vmatprep.subr.mxu0 0.0
    %66 = vmatpush1.msra.mxu0 0.0
    %67 = vmatprep.subr.mxu0 0.0
    %68 = vmatpush1.msra.mxu0 0.0
    %69 = vmatprep.subr.mxu0 0.0
    %70 = vmatpush1.msra.mxu0 0.0
    %71 = vmatprep.subr.mxu0 0.0
    %72 = vmatpush1.msra.mxu0 0.0
    %73 = vmatprep.subr.mxu0 0.0
    %74 = vmatpush1.msra.mxu0 %v49
    %75 = vmatprep.subr.mxu0 0.0
    %76 = vmatpush1.msra.mxu0 %v48
    %77 = vmatprep.subr.mxu0 0.0
    %78 = vmatpush1.msra.mxu0 %v47
    %79 = vmatprep.subr.mxu0 0.0
    %80 = vmatpush1.msra.mxu0 %v46
    %81 = vmatprep.subr.mxu0 0.0
    %82 = vmatpush1.msra.mxu0 %v45
    %83 = vmatprep.subr.mxu0 0.0
    %84 = vmatpush1.msra.mxu0 %v44
    %85 = vmatprep.subr.mxu0 0.0
    %86 = vmatpush1.msra.mxu0 %v43
    %87 = vmatprep.subr.mxu0 0.0
    %88 = vmatpush1.msra.mxu0 %v42
    %89 = vmatprep.subr.mxu0 0.0
    %90 = vmatpush2.msra.mxu0 0.0
    %91 = vmatprep.subr.mxu0 0.0
    %92 = vmatpush2.msra.mxu0 0.0
    %93 = vmatprep.subr.mxu0 0.0
    %94 = vmatpush2.msra.mxu0 0.0
    %95 = vmatprep.subr.mxu0 0.0
    %96 = vmatpush2.msra.mxu0 0.0
    %97 = vmatprep.subr.mxu0 0.0
    %98 = vmatpush2.msra.mxu0 0.0
    %99 = vmatprep.subr.mxu0 0.0
    %100 = vmatpush2.msra.mxu0 0.0
    %101 = vmatprep.subr.mxu0 0.0
    %102 = vmatpush2.msra.mxu0 0.0
    %103 = vmatprep.subr.mxu0 0.0
    %104 = vmatpush2.msra.mxu0 0.0
    %105 = vmatprep.subr.mxu0 0.0
    %106 = vmatpush2.msra.mxu0 0.0
    %107 = vmatprep.subr.mxu0 0.0
    %108 = vmatpush2.msra.mxu0 0.0
    %109 = vmatprep.subr.mxu0 0.0
    %110 = vmatpush2.msra.mxu0 0.0
    %111 = vmatprep.subr.mxu0 0.0
    %112 = vmatpush2.msra.mxu0 0.0
    %113 = vmatprep.subr.mxu0 0.0
    %114 = vmatpush2.msra.mxu0 0.0
    %115 = vmatprep.subr.mxu0 0.0
    %116 = vmatpush2.msra.mxu0 0.0
    %117 = vmatprep.subr.mxu0 0.0
    %118 = vmatpush2.msra.mxu0 0.0
    %119 = vmatprep.subr.mxu0 0.0
    %120 = vmatpush2.msra.mxu0 0.0
    %121 = vmatprep.mubr.f32.mxu0 0.0
    %122 = vmatmul.mubr.f32.gmra.mxu0 %v52
    %v123 = vpop.f32.mrf.mxu0
    %v124 = vadd.f32 0.0, %v123
    %v125 = vpop.f32.mrf.mxu0
    %126 = vmatprep.mubr.f32.mxu0 0.0
    %127 = vmatmul.mubr.f32.gmra.mxu0 %v55
    %v128 = vpop.f32.mrf.mxu0
    %v129 = vadd.f32 0.0, %v128
    %v130 = vpop.f32.mrf.mxu0
    %131 = vdwg.mxu0
    %132 = vst [vmem:[#allocation5] sm:$0xff] %v124
    %133 = vst [vmem:[#allocation5 + $0x8] sm:$0xff] %v129
    // Predicated region
    $region14: #{tpu_custom_call.1} parent=1 // pred_check
      _
    $region15: #{tpu_custom_call.1} parent=1 // pred_check_branch
      %135 = sbr.rel (0) target = $region17
    $region16: #{tpu_custom_call.1} parent=1 // pred_region
      %s137 = ssub.s32 256, 256
      %138 = vsyncadd [#allocation4], %s137
      %s139 = sshll.u32 [#allocation5], 4
      %s140 = int_to_ptr.vmem [resolvable:$true] %s139
      %145 = dma.vmem_to_hbm [thread:$0]  %s140, 256, %s2, [#allocation4], 128, 128, 8
    $region17: #{tpu_custom_call.1} parent=1 // pred_fallthru
      _
    // Predicated region
    $region18: #{tpu_custom_call.1} parent=1 // pred_check
      _
    $region19: #{tpu_custom_call.1} parent=1 // pred_check_branch
      %147 = sbr.rel (0) target = $region21
    $region20: #{tpu_custom_call.1} parent=1 // pred_region
      %148 = dma.done [#allocation4], 256
    $region21: #{tpu_custom_call.1} parent=1 // pred_fallthru
      _
    %149 = vsyncpa [#allocation3], 1
    %150 = vsyncpa [#allocation4], 1

</llo_original>
